<compile_context>
chip_gen: v6e
topology: v6e:2x2x1
jax: 0.10.0
libtpu: 0.0.40
codegen_flags: <defaults>
</compile_context>

<pallas_src>
import math

import jax
import jax.numpy as jnp
from jax.experimental import pallas as pl
from jax.experimental.pallas import tpu as pltpu


def _word_encoder_kernel(x_ref, w_ref, o_ref):
    # MXU matmul with f32 accumulation, tanh on the EUP, fused in one kernel.
    acc = jnp.dot(x_ref[...], w_ref[...], preferred_element_type=jnp.float32)
    o_ref[...] = jnp.tanh(acc).astype(o_ref.dtype)


def _vmem_capacity_bytes() -> int:
    """Physical VMEM of the current chip; conservative fallback = 64 MiB (v7x)."""
    try:
        return int(pltpu.get_tpu_info().vmem_capacity_bytes)
    except Exception:
        return 64 << 20


def word_encoder_forward(word_embeddings: jax.Array,
                         encoder_weights: jax.Array,
                         *,
                         block_m: int = 4096,
                         use_pallas=None,
                         min_pallas_batch: int = 512,
                         x_buffer_count=None) -> jax.Array:
    """tanh(x @ W) with the batch dimension tiled across the grid.

    x is streamed in whatever dtype the caller provides (no wrapper-side cast:
    that would add a full extra HBM round-trip on a bandwidth-bound op).  W is
    cast to x.dtype (it is a few KiB).  Accumulation and tanh are f32; output
    keeps x's dtype.

    use_pallas: None = auto (bypass Pallas for small batches), True/False force.
    x_buffer_count: optional pipeline depth for the x stream (sweep 3 on
        v5e/v6e if the per-step DMA is still exposed; keep default on v7x).
    """
    batch, input_dim = word_embeddings.shape
    in_dim_w, output_dim = encoder_weights.shape
    assert input_dim == in_dim_w

    x = word_embeddings
    w = encoder_weights
    if w.dtype != x.dtype:
        w = w.astype(x.dtype)            # W is tiny; keeps the kernel homogeneous
    out_dtype = x.dtype

    if use_pallas is None:
        use_pallas = batch >= min_pallas_batch
    if not use_pallas:
        # Small-batch bypass: let XLA fuse this with neighboring ops instead of
        # paying the custom-call + DMA-setup overhead for a few KiB of work.
        y = jnp.dot(x, w, preferred_element_type=jnp.float32)
        return jnp.tanh(y).astype(out_dtype)

    x_bytes = jnp.dtype(x.dtype).itemsize
    w_bytes = jnp.dtype(w.dtype).itemsize
    o_bytes = jnp.dtype(out_dtype).itemsize

    # Sublane alignment: sub-32-bit dtypes pack rows along sublanes.
    align = {4: 8, 2: 16, 1: 32}.get(x_bytes, 8)

    # --- Tile selection ------------------------------------------------------
    # Biggest batch tile that fits ~37% of this chip's physical VMEM when
    # double-buffered (x tile in + out tile back), leaving headroom for the
    # weight block, the 2-deep pipeline and compiler scratch.
    vmem_budget = (_vmem_capacity_bytes() * 3) // 8
    per_row_bytes = input_dim * x_bytes + output_dim * o_bytes
    max_rows = max(align, vmem_budget // (2 * per_row_bytes))

    tm = min(block_m, batch, max_rows)

    # Guarantee >= 2 grid steps on big batches so ("parallel",) semantics can
    # shard the grid across v7x's 2 TensorCores (and their HBM bandwidth).
    if batch >= 1024:
        half = pl.cdiv(batch, 2)
        half_aligned = ((half + align - 1) // align) * align
        tm = min(tm, half_aligned)

    if tm < batch:
        # When actually tiling, keep tm aligned to the packed-sublane
        # granularity; a full-extent tile (tm == batch) is always legal.
        tm = max(align, (tm // align) * align)

    grid = (pl.cdiv(batch, tm),)

    # Explicit scoped-VMEM limit: double-buffered x tile + W + out tile plus
    # compiler headroom.  Clamped to [16 MiB, 48 MiB] so it never exceeds
    # v7x's 64 MiB physical VMEM while still lifting v5e's 16 MiB default.
    vmem_limit = (2 * tm * input_dim * x_bytes
                  + 2 * input_dim * output_dim * w_bytes
                  + 2 * tm * output_dim * o_bytes
                  + (4 << 20))
    vmem_limit = int(min(max(vmem_limit, 16 << 20), 48 << 20))

    # Advisory cost estimate so XLA schedules surrounding HLO for overlap.
    cost = pl.CostEstimate(
        flops=2 * batch * input_dim * output_dim,
        transcendentals=batch * output_dim,
        bytes_accessed=(batch * input_dim * x_bytes
                        + input_dim * output_dim * w_bytes
                        + batch * output_dim * o_bytes),
    )

    # x stream spec; optional deeper buffering (sweepable, default pipeline).
    if x_buffer_count is None:
        x_spec = pl.BlockSpec((tm, input_dim), lambda i: (i, 0))
    else:
        x_spec = pl.BlockSpec((tm, input_dim), lambda i: (i, 0),
                              pipeline_mode=pl.Buffered(x_buffer_count))

    # NOTE on output layout: out block is (tm, 4) -> masked vst on the lane
    # dim.  Output bytes are tiny (4 cols vs 512 cols read); revisit with the
    # zero-extra-bytes lane-dense repack only if profiling shows wall >> DMA.
    return pl.pallas_call(
        _word_encoder_kernel,
        out_shape=jax.ShapeDtypeStruct((batch, output_dim), out_dtype),
        grid_spec=pltpu.PrefetchScalarGridSpec(
            num_scalar_prefetch=0,
            grid=grid,
            in_specs=[
                x_spec,
                # Constant (0, 0) block index: the Pallas pipeline skips the
                # re-DMA when consecutive grid steps map to the same block, so
                # the few-KiB weight stays resident across the whole grid.
                pl.BlockSpec((input_dim, output_dim), lambda i: (0, 0)),
            ],
            out_specs=pl.BlockSpec((tm, output_dim), lambda i: (i, 0)),
        ),
        compiler_params=pltpu.CompilerParams(
            dimension_semantics=("parallel",),   # megacore-shard the batch grid
            vmem_limit_bytes=vmem_limit,
        ),
        cost_estimate=cost,
    )(x, w)


def init_encoder_weights(key, input_dim: int, output_dim: int,
                         dtype=jnp.float32) -> jax.Array:
    """Replica of torch.nn.init.kaiming_uniform_(a=sqrt(5)) on the raw
    (input_dim, output_dim) Parameter used by WordEncoder.

    torch's _calculate_fan_in_and_fan_out on a 2D tensor uses
    fan_in = tensor.size(1) = output_dim here (a raw Parameter of shape
    (input_dim, output_dim), NOT an nn.Linear weight),
    gain = sqrt(2 / (1 + a^2)), bound = gain * sqrt(3 / fan_in).
    """
    a = math.sqrt(5.0)
    fan_in = output_dim
    gain = math.sqrt(2.0 / (1.0 + a * a))
    bound = gain * math.sqrt(3.0 / fan_in)
    return jax.random.uniform(key, (input_dim, output_dim), dtype=dtype,
                              minval=-bound, maxval=bound)


if __name__ == "__main__":
    input_dim = 512
    output_dim = 4

    key = jax.random.PRNGKey(0)
    k_w, k_x_small, k_x_mid = jax.random.split(key, 3)

    encoder_weights = init_encoder_weights(k_w, input_dim, output_dim)

    # --- 1) Small batch: force the Pallas kernel (exercise the kernel path) --
    batch = 8
    x_small = jax.random.normal(k_x_small, (batch, input_dim), dtype=jnp.float32)

    out = word_encoder_forward(x_small, encoder_weights, use_pallas=True)
    out = jax.block_until_ready(out)
    ref = jnp.tanh(x_small @ encoder_weights)
    assert out.shape == (batch, output_dim)
    assert out.dtype == jnp.float32
    assert jnp.allclose(out, ref, atol=1e-5, rtol=1e-5)

    # Auto-dispatch at this size takes the plain-JAX bypass; must match too.
    out_auto = jax.block_until_ready(word_encoder_forward(x_small, encoder_weights))
    assert jnp.allclose(out_auto, ref, atol=1e-5, rtol=1e-5)

    # --- 2) Tiled grid with a ragged last tile (batch % tm != 0) -------------
    mid_batch = 200
    x_mid = jax.random.normal(k_x_mid, (mid_batch, input_dim), dtype=jnp.float32)

    out_mid = word_encoder_forward(x_mid, encoder_weights,
                                   block_m=64, use_pallas=True)
    out_mid = jax.block_until_ready(out_mid)
    ref_mid = jnp.tanh(x_mid @ encoder_weights)
    assert out_mid.shape == (mid_batch, output_dim)
    assert jnp.allclose(out_mid, ref_mid, atol=1e-5, rtol=1e-5)

    print("KERNEL_OK")
</pallas_src>

<mosaic_0001>
module attributes {stable_mosaic.version = 11 : i64} {
  func.func @_word_encoder_kernel(%arg0: i32, %arg1: memref<8x512xf32, #tpu.memory_space<vmem>>, %arg2: memref<512x4xf32, #tpu.memory_space<vmem>>, %arg3: memref<8x4xf32, #tpu.memory_space<vmem>>) attributes {dimension_semantics = [#tpu.dimension_semantics<parallel>], iteration_bounds = array<i64: 1>, scalar_prefetch = 0 : i64, scratch_operands = 0 : i64, tpu.core_type = #tpu.core_type<tc>, window_params = [{transform_indices = @transform_0, window_bounds = array<i64: 8, 512>}, {pipeline_mode = #tpu.pipeline_mode<synchronous>, transform_indices = @transform_1, window_bounds = array<i64: 512, 4>}, {transform_indices = @transform_2, window_bounds = array<i64: 8, 4>}]} {
    %c0 = arith.constant 0 : index
    %c0_0 = arith.constant 0 : index
    %0 = vector.load %arg1[%c0, %c0_0] : memref<8x512xf32, #tpu.memory_space<vmem>>, vector<8x512xf32>
    %c0_1 = arith.constant 0 : index
    %c0_2 = arith.constant 0 : index
    %1 = vector.load %arg2[%c0_1, %c0_2] : memref<512x4xf32, #tpu.memory_space<vmem>>, vector<512x4xf32>
    %cst = arith.constant dense<0.000000e+00> : vector<8x4xf32>
    %2 = tpu.matmul %0, %1, %cst {dimension_numbers = #tpu.dot_dimension_numbers<[1], [0], [0], [1], [0, 0, 1, 1], [], []>} : vector<8x512xf32>, vector<512x4xf32>, vector<8x4xf32> -> vector<8x4xf32>
    %3 = math.tanh %2 : vector<8x4xf32>
    %c0_3 = arith.constant 0 : index
    %c0_4 = arith.constant 0 : index
    %4 = vector.load %arg3[%c0_3, %c0_4] : memref<8x4xf32, #tpu.memory_space<vmem>>, vector<8x4xf32>
    tpu.vector_store %arg3[%c0_3, %c0_4], %3 {strides = array<i32>} : memref<8x4xf32, #tpu.memory_space<vmem>>, vector<8x4xf32>,
    return
  }
  func.func @transform_0(%arg0: i32) -> (i32, i32) {
    %c0_i32 = arith.constant 0 : i32
    %c0_i32_0 = arith.constant 0 : i32
    return %arg0, %c0_i32 : i32, i32
  }
  func.func @transform_1(%arg0: i32) -> (i32, i32) {
    %c0_i32 = arith.constant 0 : i32
    %c0_i32_0 = arith.constant 0 : i32
    %c0_i32_1 = arith.constant 0 : i32
    return %c0_i32, %c0_i32_0 : i32, i32
  }
  func.func @transform_2(%arg0: i32) -> (i32, i32) {
    %c0_i32 = arith.constant 0 : i32
    %c0_i32_0 = arith.constant 0 : i32
    return %arg0, %c0_i32 : i32, i32
  }
}

</mosaic_0001>

<llo_original>
// kernel: tpu_custom_call.1
$region0: #{tpu_custom_call.1}
  #allocation0 [shape = 'u32[]', space=smem, size = 0x4, offset = 0x4, fixed_abs, tag = 'smem constant byte address 0x4 - core index']
  #allocation1 [shape = 'u32[144,128]{1,0:T(1,128)}', space=vmem, size = 0x12000, scoped, tag = 'internal scratch']
  %s0 = inlined_call_operand.vmem [shape: f32[8,512], index: 0, kind: input, shape index: {}]
  %s1 = inlined_call_operand.vmem [shape: f32[512,4], index: 1, kind: input, shape index: {}]
  %s2 = inlined_call_operand.vmem [shape: f32[8,4], index: 2, kind: output, shape index: {}]
  %s3 = sld [smem:[#allocation0]]
  $region18: #{tpu_custom_call.1} parent=0
    _
  %s5 = ssub.s32 1, %s3
  %s6 = scalar_select 0, %s5, %s3
  // Predicated region
  $region2: #{tpu_custom_call.1} parent=0 // pred_check
    _
  $region3: #{tpu_custom_call.1} parent=0 // pred_check_branch
    %8 = sbr.rel (0) target = $region5
  $region4: #{tpu_custom_call.1} parent=0 // pred_region
    _
  $region5: #{tpu_custom_call.1} parent=0 // pred_fallthru
    _
  // Predicated region
  $region6: #{tpu_custom_call.1} parent=0 // pred_check
    _
  $region7: #{tpu_custom_call.1} parent=0 // pred_check_branch
    %10 = sbr.rel (0) target = $region9
  $region8: #{tpu_custom_call.1} parent=0 // pred_region
    _
  $region9: #{tpu_custom_call.1} parent=0 // pred_fallthru
    _
  %v11 = vld [vmem:[%s0] sm:$0xff]
  %v12 = vld [vmem:[%s0 + $0x8] sm:$0xff]
  %v13 = vld [vmem:[%s0 + $0x10] sm:$0xff]
  %v14 = vld [vmem:[%s0 + $0x18] sm:$0xff]
  %v15 = vld [vmem:[%s1] sm:$0xff]
  %v16 = vld [vmem:[%s1 + $0x8] sm:$0xff]
  %v17 = vld [vmem:[%s1 + $0x10] sm:$0xff]
  %v18 = vld [vmem:[%s1 + $0x18] sm:$0xff]
  %v19 = vld [vmem:[%s1 + $0x20] sm:$0xff]
  %v20 = vld [vmem:[%s1 + $0x28] sm:$0xff]
  %v21 = vld [vmem:[%s1 + $0x30] sm:$0xff]
  %v22 = vld [vmem:[%s1 + $0x38] sm:$0xff]
  %v23 = vld [vmem:[%s1 + $0x40] sm:$0xff]
  %v24 = vld [vmem:[%s1 + $0x48] sm:$0xff]
  %v25 = vld [vmem:[%s1 + $0x50] sm:$0xff]
  %v26 = vld [vmem:[%s1 + $0x58] sm:$0xff]
  %v27 = vld [vmem:[%s1 + $0x60] sm:$0xff]
  %v28 = vld [vmem:[%s1 + $0x68] sm:$0xff]
  %v29 = vld [vmem:[%s1 + $0x70] sm:$0xff]
  %v30 = vld [vmem:[%s1 + $0x78] sm:$0xff]
  %v31 = vld [vmem:[%s1 + $0x80] sm:$0xff]
  %v32 = vld [vmem:[%s1 + $0x88] sm:$0xff]
  %v33 = vld [vmem:[%s1 + $0x90] sm:$0xff]
  %v34 = vld [vmem:[%s1 + $0x98] sm:$0xff]
  %v35 = vld [vmem:[%s1 + $0xa0] sm:$0xff]
  %v36 = vld [vmem:[%s1 + $0xa8] sm:$0xff]
  %v37 = vld [vmem:[%s1 + $0xb0] sm:$0xff]
  %v38 = vld [vmem:[%s1 + $0xb8] sm:$0xff]
  %v39 = vld [vmem:[%s1 + $0xc0] sm:$0xff]
  %v40 = vld [vmem:[%s1 + $0xc8] sm:$0xff]
  %v41 = vld [vmem:[%s1 + $0xd0] sm:$0xff]
  %v42 = vld [vmem:[%s1 + $0xd8] sm:$0xff]
  %v43 = vld [vmem:[%s1 + $0xe0] sm:$0xff]
  %v44 = vld [vmem:[%s1 + $0xe8] sm:$0xff]
  %v45 = vld [vmem:[%s1 + $0xf0] sm:$0xff]
  %v46 = vld [vmem:[%s1 + $0xf8] sm:$0xff]
  %v47 = vld [vmem:[%s1 + $0x100] sm:$0xff]
  %v48 = vld [vmem:[%s1 + $0x108] sm:$0xff]
  %v49 = vld [vmem:[%s1 + $0x110] sm:$0xff]
  %v50 = vld [vmem:[%s1 + $0x118] sm:$0xff]
  %v51 = vld [vmem:[%s1 + $0x120] sm:$0xff]
  %v52 = vld [vmem:[%s1 + $0x128] sm:$0xff]
  %v53 = vld [vmem:[%s1 + $0x130] sm:$0xff]
  %v54 = vld [vmem:[%s1 + $0x138] sm:$0xff]
  %v55 = vld [vmem:[%s1 + $0x140] sm:$0xff]
  %v56 = vld [vmem:[%s1 + $0x148] sm:$0xff]
  %v57 = vld [vmem:[%s1 + $0x150] sm:$0xff]
  %v58 = vld [vmem:[%s1 + $0x158] sm:$0xff]
  %v59 = vld [vmem:[%s1 + $0x160] sm:$0xff]
  %v60 = vld [vmem:[%s1 + $0x168] sm:$0xff]
  %v61 = vld [vmem:[%s1 + $0x170] sm:$0xff]
  %v62 = vld [vmem:[%s1 + $0x178] sm:$0xff]
  %v63 = vld [vmem:[%s1 + $0x180] sm:$0xff]
  %v64 = vld [vmem:[%s1 + $0x188] sm:$0xff]
  %v65 = vld [vmem:[%s1 + $0x190] sm:$0xff]
  %v66 = vld [vmem:[%s1 + $0x198] sm:$0xff]
  %v67 = vld [vmem:[%s1 + $0x1a0] sm:$0xff]
  %v68 = vld [vmem:[%s1 + $0x1a8] sm:$0xff]
  %v69 = vld [vmem:[%s1 + $0x1b0] sm:$0xff]
  %v70 = vld [vmem:[%s1 + $0x1b8] sm:$0xff]
  %v71 = vld [vmem:[%s1 + $0x1c0] sm:$0xff]
  %v72 = vld [vmem:[%s1 + $0x1c8] sm:$0xff]
  %v73 = vld [vmem:[%s1 + $0x1d0] sm:$0xff]
  %v74 = vld [vmem:[%s1 + $0x1d8] sm:$0xff]
  %v75 = vld [vmem:[%s1 + $0x1e0] sm:$0xff]
  %v76 = vld [vmem:[%s1 + $0x1e8] sm:$0xff]
  %v77 = vld [vmem:[%s1 + $0x1f0] sm:$0xff]
  %v78 = vld [vmem:[%s1 + $0x1f8] sm:$0xff]
  %79 = vmatprep.subr.mxu0 0.0
  %80 = vmatpush1.msra.mxu0 %v30
  %81 = vmatprep.subr.mxu0 0.0
  %82 = vmatpush1.msra.mxu0 %v29
  %83 = vmatprep.subr.mxu0 0.0
  %84 = vmatpush1.msra.mxu0 %v28
  %85 = vmatprep.subr.mxu0 0.0
  %86 = vmatpush1.msra.mxu0 %v27
  %87 = vmatprep.subr.mxu0 0.0
  %88 = vmatpush1.msra.mxu0 %v26
  %89 = vmatprep.subr.mxu0 0.0
  %90 = vmatpush1.msra.mxu0 %v25
  %91 = vmatprep.subr.mxu0 0.0
  %92 = vmatpush1.msra.mxu0 %v24
  %93 = vmatprep.subr.mxu0 0.0
  %94 = vmatpush1.msra.mxu0 %v23
  %95 = vmatprep.subr.mxu0 0.0
  %96 = vmatpush1.msra.mxu0 %v22
  %97 = vmatprep.subr.mxu0 0.0
  %98 = vmatpush1.msra.mxu0 %v21
  %99 = vmatprep.subr.mxu0 0.0
  %100 = vmatpush1.msra.mxu0 %v20
  %101 = vmatprep.subr.mxu0 0.0
  %102 = vmatpush1.msra.mxu0 %v19
  %103 = vmatprep.subr.mxu0 0.0
  %104 = vmatpush1.msra.mxu0 %v18
  %105 = vmatprep.subr.mxu0 0.0
  %106 = vmatpush1.msra.mxu0 %v17
  %107 = vmatprep.subr.mxu0 0.0
  %108 = vmatpush1.msra.mxu0 %v16
  %109 = vmatprep.subr.mxu0 0.0
  %110 = vmatpush1.msra.mxu0 %v15
  %111 = vmatprep.subr.mxu0 0.0
  %112 = vmatpush2.msra.mxu0 %v46
  %113 = vmatprep.subr.mxu0 0.0
  %114 = vmatpush2.msra.mxu0 %v45
  %115 = vmatprep.subr.mxu0 0.0
  %116 = vmatpush2.msra.mxu0 %v44
  %117 = vmatprep.subr.mxu0 0.0
  %118 = vmatpush2.msra.mxu0 %v43
  %119 = vmatprep.subr.mxu0 0.0
  %120 = vmatpush2.msra.mxu0 %v42
  %121 = vmatprep.subr.mxu0 0.0
  %122 = vmatpush2.msra.mxu0 %v41
  %123 = vmatprep.subr.mxu0 0.0
  %124 = vmatpush2.msra.mxu0 %v40
  %125 = vmatprep.subr.mxu0 0.0
  %126 = vmatpush2.msra.mxu0 %v39
  %127 = vmatprep.subr.mxu0 0.0
  %128 = vmatpush2.msra.mxu0 %v38
  %129 = vmatprep.subr.mxu0 0.0
  %130 = vmatpush2.msra.mxu0 %v37
  %131 = vmatprep.subr.mxu0 0.0
  %132 = vmatpush2.msra.mxu0 %v36
  %133 = vmatprep.subr.mxu0 0.0
  %134 = vmatpush2.msra.mxu0 %v35
  %135 = vmatprep.subr.mxu0 0.0
  %136 = vmatpush2.msra.mxu0 %v34
  %137 = vmatprep.subr.mxu0 0.0
  %138 = vmatpush2.msra.mxu0 %v33
  %139 = vmatprep.subr.mxu0 0.0
  %140 = vmatpush2.msra.mxu0 %v32
  %141 = vmatprep.subr.mxu0 0.0
  %142 = vmatpush2.msra.mxu0 %v31
  %143 = vmatprep.mubr.f32.mxu0 %v12
  %144 = vmatmul.mubr.f32.gmra.mxu0 %v11
  %v145 = vpop.f32.mrf.mxu0
  %v146 = vadd.f32 0.0, %v145
  %v147 = vpop.f32.mrf.mxu0
  %148 = vdwg.mxu0
  %149 = vmatprep.subr.mxu0 0.0
  %150 = vmatpush1.msra.mxu0 %v62
  %151 = vmatprep.subr.mxu0 0.0
  %152 = vmatpush1.msra.mxu0 %v61
  %153 = vmatprep.subr.mxu0 0.0
  %154 = vmatpush1.msra.mxu0 %v60
  %155 = vmatprep.subr.mxu0 0.0
  %156 = vmatpush1.msra.mxu0 %v59
  %157 = vmatprep.subr.mxu0 0.0
  %158 = vmatpush1.msra.mxu0 %v58
  %159 = vmatprep.subr.mxu0 0.0
  %160 = vmatpush1.msra.mxu0 %v57
  %161 = vmatprep.subr.mxu0 0.0
  %162 = vmatpush1.msra.mxu0 %v56
  %163 = vmatprep.subr.mxu0 0.0
  %164 = vmatpush1.msra.mxu0 %v55
  %165 = vmatprep.subr.mxu0 0.0
  %166 = vmatpush1.msra.mxu0 %v54
  %167 = vmatprep.subr.mxu0 0.0
  %168 = vmatpush1.msra.mxu0 %v53
  %169 = vmatprep.subr.mxu0 0.0
  %170 = vmatpush1.msra.mxu0 %v52
  %171 = vmatprep.subr.mxu0 0.0
  %172 = vmatpush1.msra.mxu0 %v51
  %173 = vmatprep.subr.mxu0 0.0
  %174 = vmatpush1.msra.mxu0 %v50
  %175 = vmatprep.subr.mxu0 0.0
  %176 = vmatpush1.msra.mxu0 %v49
  %177 = vmatprep.subr.mxu0 0.0
  %178 = vmatpush1.msra.mxu0 %v48
  %179 = vmatprep.subr.mxu0 0.0
  %180 = vmatpush1.msra.mxu0 %v47
  %181 = vmatprep.subr.mxu0 0.0
  %182 = vmatpush2.msra.mxu0 %v78
  %183 = vmatprep.subr.mxu0 0.0
  %184 = vmatpush2.msra.mxu0 %v77
  %185 = vmatprep.subr.mxu0 0.0
  %186 = vmatpush2.msra.mxu0 %v76
  %187 = vmatprep.subr.mxu0 0.0
  %188 = vmatpush2.msra.mxu0 %v75
  %189 = vmatprep.subr.mxu0 0.0
  %190 = vmatpush2.msra.mxu0 %v74
  %191 = vmatprep.subr.mxu0 0.0
  %192 = vmatpush2.msra.mxu0 %v73
  %193 = vmatprep.subr.mxu0 0.0
  %194 = vmatpush2.msra.mxu0 %v72
  %195 = vmatprep.subr.mxu0 0.0
  %196 = vmatpush2.msra.mxu0 %v71
  %197 = vmatprep.subr.mxu0 0.0
  %198 = vmatpush2.msra.mxu0 %v70
  %199 = vmatprep.subr.mxu0 0.0
  %200 = vmatpush2.msra.mxu0 %v69
  %201 = vmatprep.subr.mxu0 0.0
  %202 = vmatpush2.msra.mxu0 %v68
  %203 = vmatprep.subr.mxu0 0.0
  %204 = vmatpush2.msra.mxu0 %v67
  %205 = vmatprep.subr.mxu0 0.0
  %206 = vmatpush2.msra.mxu0 %v66
  %207 = vmatprep.subr.mxu0 0.0
  %208 = vmatpush2.msra.mxu0 %v65
  %209 = vmatprep.subr.mxu0 0.0
  %210 = vmatpush2.msra.mxu0 %v64
  %211 = vmatprep.subr.mxu0 0.0
  %212 = vmatpush2.msra.mxu0 %v63
  %213 = vmatprep.mubr.f32.mxu0 %v14
  %214 = vmatmul.mubr.f32.gmra.mxu0 %v13
  %v215 = vpop.f32.mrf.mxu0
  %v216 = vadd.f32 %v146, %v215
  %v217 = vpop.f32.mrf.mxu0
  %218 = vdwg.mxu0
  %v219 = vtanh.pop %v216
  %vm220 = vcmask 31744
  %221 = vst.msk [vmem:[%s2] sm:$0xff] %vm220, %v219
  // Predicated region
  $region10: #{tpu_custom_call.1} parent=0 // pred_check
    _
  $region11: #{tpu_custom_call.1} parent=0 // pred_check_branch
    %223 = sbr.rel (0) target = $region13
  $region12: #{tpu_custom_call.1} parent=0 // pred_region
    _
  $region13: #{tpu_custom_call.1} parent=0 // pred_fallthru
    _
  // Predicated region
  $region14: #{tpu_custom_call.1} parent=0 // pred_check
    _
  $region15: #{tpu_custom_call.1} parent=0 // pred_check_branch
    %225 = sbr.rel (0) target = $region17
  $region16: #{tpu_custom_call.1} parent=0 // pred_region
    _
  $region17: #{tpu_custom_call.1} parent=0 // pred_fallthru
    _

</llo_original>
